<compile_context>
chip_gen: v6e
topology: v6e:2x2x1
jax: 0.10.0
libtpu: 0.0.40
codegen_flags: <defaults>
</compile_context>

<pallas_src>
import jax
import jax.numpy as jnp
from jax.experimental import pallas as pl
from jax.experimental.pallas import tpu as pltpu


_SMALL_BYTES = 512 << 10        # <= 512 KiB: single-block fast path
_DEFAULT_BLOCK_BYTES = 4 << 20  # fallback / v7x-safe per-block byte budget


def _sin_kernel(x_ref, o_ref):
    # Pure elementwise transcendental: one EUP pass over the VMEM tile.
    o_ref[...] = jnp.sin(x_ref[...])


def _sublane(dtype) -> int:
    # Sublane packing: 8 for f32, 16 for bf16/f16, 32 for 8-bit types.
    itemsize = jnp.dtype(dtype).itemsize
    return max(8, 32 // max(itemsize, 1))


def _pick_block_bytes() -> int:
    """Generation-aware per-block budget (double-buffered in+out => 4x this)."""
    try:
        info = pltpu.get_tpu_info()
        vmem = int(getattr(info, "vmem_capacity_bytes", 0)) or (64 << 20)
    except Exception:
        vmem = 64 << 20  # conservative fallback
    if vmem >= (100 << 20):      # v5e / v6e: 128 MiB physical VMEM
        return 6 << 20           # ~24 MiB double-buffered footprint
    return _DEFAULT_BLOCK_BYTES  # v7x: 64 MiB physical -> ~16 MiB footprint


def _sin_small(flat, n, dtype):
    # Single whole-array block; no grid, no padding, no slicing.
    cols = next((c for c in (1024, 512, 256, 128) if n % c == 0), None)
    x2d = flat.reshape(n // cols, cols) if cols else flat.reshape(1, n)
    out = pl.pallas_call(
        _sin_kernel,
        out_shape=jax.ShapeDtypeStruct(x2d.shape, dtype),
    )(x2d)
    return out.reshape(-1)


def sin(x: jax.Array) -> jax.Array:
    """Elementwise sin(x) via a Pallas TPU kernel. Any shape / rank."""
    orig_shape = x.shape
    if x.size == 0:
        return jnp.sin(x)
    # torch.sin promotes integer inputs to floating point.
    if not jnp.issubdtype(x.dtype, jnp.floating):
        x = x.astype(jnp.float32)
    dtype = x.dtype
    n = x.size
    itemsize = jnp.dtype(dtype).itemsize
    flat = x.reshape(-1)

    # Tiny tensors: pallas_call fixed cost dominates; use one full block.
    if n * itemsize <= _SMALL_BYTES:
        return _sin_small(flat, n, dtype).reshape(orig_shape)

    # Lane-dense 2-D view. Prefer a column width that divides n exactly so no
    # jnp.pad / [:n] slice (each an extra full HBM pass) is needed; the ragged
    # last *row* block is handled by Pallas's masked boundary block.
    cols = next((c for c in (1024, 512, 256, 128) if n % c == 0), None)
    pad = 0
    if cols is None:
        # TODO(synk): handle a non-multiple-of-128 tail with a masked final
        # block instead of a full-array pad/slice (rare for real tensors).
        cols = 1024
        pad = (-n) % cols
        flat = jnp.pad(flat, (0, pad))
    rows = (n + pad) // cols

    sub = _sublane(dtype)
    block_bytes = _pick_block_bytes()
    block_rows = max(sub, (block_bytes // (cols * itemsize)) // sub * sub)
    # Never allocate a block taller than the (sublane-rounded) array itself.
    block_rows = min(block_rows, ((rows + sub - 1) // sub) * sub)

    grid = ((rows + block_rows - 1) // block_rows,)
    x2d = flat.reshape(rows, cols)

    footprint = 4 * block_rows * cols * itemsize      # 2 bufs x (in + out)
    vmem_limit = int(min(max(footprint + (8 << 20), 24 << 20), 48 << 20))

    out2d = pl.pallas_call(
        _sin_kernel,
        out_shape=jax.ShapeDtypeStruct((rows, cols), dtype),
        grid_spec=pltpu.PrefetchScalarGridSpec(
            num_scalar_prefetch=0,
            grid=grid,
            in_specs=[pl.BlockSpec((block_rows, cols), lambda i: (i, 0))],
            out_specs=pl.BlockSpec((block_rows, cols), lambda i: (i, 0)),
        ),
        compiler_params=pltpu.CompilerParams(
            # "parallel" lets megacore (v7x: 2 TCs) shard the row-block axis.
            dimension_semantics=("parallel",),
            vmem_limit_bytes=vmem_limit,
        ),
        cost_estimate=pl.CostEstimate(
            flops=0, transcendentals=n, bytes_accessed=2 * n * itemsize),
    )(x2d)

    out_flat = out2d.reshape(-1)
    if pad:
        out_flat = out_flat[:n]
    return out_flat.reshape(orig_shape)


if __name__ == "__main__":
    key = jax.random.PRNGKey(0)
    k0, k1, k2 = jax.random.split(key, 3)

    # Small NCHW-shaped example input, consistent with the generic forward(x).
    x = jax.random.normal(k0, (2, 4, 16, 16), dtype=jnp.float32)
    y = sin(x)
    jax.block_until_ready(y)
    assert y.shape == x.shape and y.dtype == x.dtype
    assert jnp.allclose(y, jnp.sin(x), atol=1e-5, rtol=1e-5), "small path mismatch"

    # Tiled main path: multi-step grid + ragged (masked) last row block.
    x_big = jax.random.normal(k1, (2500, 1024), dtype=jnp.float32)
    y_big = sin(x_big)
    jax.block_until_ready(y_big)
    assert jnp.allclose(y_big, jnp.sin(x_big), atol=1e-5, rtol=1e-5), "tiled path mismatch"

    # Odd-size fallback path (n not a multiple of 128 -> pad + slice).
    x_odd = jax.random.normal(k2, (321, 1000), dtype=jnp.float32)
    y_odd = sin(x_odd)
    jax.block_until_ready(y_odd)
    assert jnp.allclose(y_odd, jnp.sin(x_odd), atol=1e-5, rtol=1e-5), "padded path mismatch"

    print("KERNEL_OK")
</pallas_src>

<mosaic_0001>
module attributes {stable_mosaic.version = 11 : i64} {
  func.func @_sin_kernel(%arg0: memref<2x1024xf32, #tpu.memory_space<vmem>>, %arg1: memref<2x1024xf32, #tpu.memory_space<vmem>>) attributes {dimension_semantics = [], scalar_prefetch = 0 : i64, scratch_operands = 0 : i64, tpu.core_type = #tpu.core_type<tc>} {
    %c0 = arith.constant 0 : index
    %c0_0 = arith.constant 0 : index
    %0 = vector.load %arg0[%c0, %c0_0] : memref<2x1024xf32, #tpu.memory_space<vmem>>, vector<2x1024xf32>
    %1 = math.sin %0 : vector<2x1024xf32>
    %c0_1 = arith.constant 0 : index
    %c0_2 = arith.constant 0 : index
    %2 = vector.load %arg1[%c0_1, %c0_2] : memref<2x1024xf32, #tpu.memory_space<vmem>>, vector<2x1024xf32>
    tpu.vector_store %arg1[%c0_1, %c0_2], %1 {strides = array<i32>} : memref<2x1024xf32, #tpu.memory_space<vmem>>, vector<2x1024xf32>,
    return
  }
}

</mosaic_0001>

<llo_original>
// kernel: tpu_custom_call.1
$region0: #{tpu_custom_call.1}
  #allocation0 [shape = 'u32[]', space=smem, size = 0x4, offset = 0x4, fixed_abs, tag = 'smem constant byte address 0x4 - core index']
  #allocation1 [shape = 'u32[144,128]{1,0:T(1,128)}', space=vmem, size = 0x12000, scoped, tag = 'internal scratch']
  %s0 = inlined_call_operand.hbm [shape: f32[2,1024], index: 0, kind: input, shape index: {}]
  %s1 = inlined_call_operand.hbm [shape: f32[2,1024], index: 1, kind: output, shape index: {}]
  %s2 = sld [smem:[#allocation0]]
  $region18: #{tpu_custom_call.1} parent=0
    _
  %s4 = ssub.s32 1, %s2
  %s5 = scalar_select 0, %s4, %s2
  $region1: #{tpu_custom_call.1} parent=0
    #allocation2 [shape = 'u8[8192]{0}', space=vmem, size = 0x2000, scoped, tag = 'input window, operand 0, single buffered']
    #allocation3 [shape = 's32[1]{0}', space=sflag, size = 0x4, scoped, tag = 'scoped memory for tpu_custom_call.1']
    #allocation4 [shape = 's32[1]{0}', space=sflag, size = 0x4, scoped, tag = 'scoped memory for tpu_custom_call.1']
    #allocation5 [shape = 'u8[8192]{0}', space=vmem, size = 0x2000, scoped, tag = 'output window, operand 0, single buffered']
    %6 = vsyncpa [#allocation3], 0
    %7 = vsyncpa [#allocation4], 0
    // Predicated region
    $region2: #{tpu_custom_call.1} parent=1 // pred_check
      _
    $region3: #{tpu_custom_call.1} parent=1 // pred_check_branch
      %9 = sbr.rel (0) target = $region5
    $region4: #{tpu_custom_call.1} parent=1 // pred_region
      %s11 = ssub.s32 256, 256
      %12 = vsyncadd [#allocation3], %s11
      %s14 = sshll.u32 [#allocation2], 4
      %s15 = int_to_ptr.vmem [resolvable:$true] %s14
      %17 = dma.hbm_to_vmem [thread:$0]  %s0, 256, %s15, [#allocation3]
    $region5: #{tpu_custom_call.1} parent=1 // pred_fallthru
      _
    // Predicated region
    $region6: #{tpu_custom_call.1} parent=1 // pred_check
      _
    $region7: #{tpu_custom_call.1} parent=1 // pred_check_branch
      %19 = sbr.rel (0) target = $region9
    $region8: #{tpu_custom_call.1} parent=1 // pred_region
      %20 = dma.done [#allocation3], 256
    $region9: #{tpu_custom_call.1} parent=1 // pred_fallthru
      _
    %v21 = vld [vmem:[#allocation2] sm:$0xff]
    %v22 = vld [vmem:[#allocation2 + $0x8] sm:$0xff]
    %v23 = vand.u32 2147483647, %v21
    %vm24 = vcmp.le.f32.partialorder %v23, 0.7853982
    %vm25 = vcmp.lt.s32.totalorder %v21, 0
    %v26 = vand.u32 %v21, 2139095040
    %v27 = vshrl.u32 %v26, 23
    %v28 = vsub.s32 %v27, 127
    %v29 = vand.u32 2147483647, %v21
    %v30 = vand.u32 %v29, 8388607
    %v31 = vor.u32 %v30, 8388608
    %v32 = vsub.s32 0, %v31
    %v33 = vadd.s32 %v28, 1
    %vm34 = vcmp.gt.s32.totalorder %v33, 0
    %v35 = vsel %vm34, %v33, 0
    %v36 = vshrl.u32 %v35, 5
    %v37 = vand.u32 %v35, 31
    %v38 = vsub.s32 32, %v37
    %v39 = vshrl.u32 683565275, %v38
    %v40 = vshll.u32 683565275, %v37
    %v41 = vshrl.u32 2475754826, %v38
    %v42 = vor.u32 %v40, %v41
    %v43 = vshll.u32 2475754826, %v37
    %v44 = vshrl.u32 2131351028, %v38
    %v45 = vor.u32 %v43, %v44
    %v46 = vshll.u32 2131351028, %v37
    %v47 = vshrl.u32 2102212464, %v38
    %v48 = vor.u32 %v46, %v47
    %v49 = vshll.u32 2102212464, %v37
    %v50 = vshrl.u32 920167782, %v38
    %v51 = vor.u32 %v49, %v50
    %v52 = vshll.u32 920167782, %v37
    %v53 = vshrl.u32 1326507024, %v38
    %v54 = vor.u32 %v52, %v53
    %vm55 = vcmp.lt.s32.totalorder %v36, 1
    %vm56 = vcmp.lt.s32.totalorder %v36, 2
    %vm57 = vcmp.lt.s32.totalorder %v36, 3
    %vm58 = vcmp.lt.s32.totalorder %v36, 4
    %v59 = vsel %vm55, %v39, %v42
    %v60 = vsel %vm58, %v48, 2102212464
    %v61 = vsel %vm57, %v45, %v60
    %v62 = vsel %vm56, %v59, %v61
    %v63 = vsel %vm55, %v42, %v45
    %v64 = vsel %vm58, %v51, 920167782
    %v65 = vsel %vm57, %v48, %v64
    %v66 = vsel %vm56, %v63, %v65
    %v67 = vsel %vm55, %v45, %v48
    %v68 = vsel %vm58, %v54, 1326507024
    %v69 = vsel %vm57, %v51, %v68
    %v70 = vsel %vm56, %v67, %v69
    %v71 = vshll.u32 %v31, 8
    %v72 = vmul.u32.u64.compose %v71, %v70
    %v73 = vextract.low.u32 %v72
    %v74 = vextract.high.u32 %v72
    %v75 = vmul.u32.u64.compose %v71, %v66
    %v76 = vextract.low.u32 %v75
    %v77 = vextract.high.u32 %v75
    %v78 = vmul.u32 %v71, %v62
    %v79 = vadd.s32 %v74, %v76
    %vm80 = vc.u32 %v74, %v76
    %v81 = vadd.s32 %v77, 1
    %v82 = vsel %vm80, %v81, %v77
    %v83 = vadd.s32 %v78, %v82
    %v84 = vadd.s32 %v83, 536870912
    %v85 = vshrl.u32 %v84, 30
    %v86 = vshll.u32 %v85, 30
    %v87 = vsub.s32 %v83, %v86
    %vm88 = vcmp.lt.s32.totalorder %v87, 0
    %v89 = vsub.s32 0, %v87
    %v90 = vsel %vm88, %v89, %v87
    %v91 = vclz %v90
    %v92 = vsub.s32 %v91, 2
    %vm93 = vcmp.gt.s32.totalorder 0, %v92
    %v94 = vsel %vm93, 0, %v92
    %v95 = vsub.s32 32, %v94
    %v96 = vshll.u32 %v87, %v94
    %v97 = vshrl.u32 %v79, %v95
    %v98 = vor.u32 %v96, %v97
    %v99 = vsub.s32 4294967266, %v94
    %v100 = vadd.s32 %v99, 127
    %v101 = vshll.u32 %v100, 23
    %v102 = vor.u32 4788187, %v101
    %v103 = vand.u32 2147483647, %v102
    %v105 = vcvt.s32.f32 %v98
    %v106 = vmul.f32 %v105, %v103
    %v107 = vxor.u32 %v106, 2147483648
    %v108 = vsel %vm25, %v107, %v106
    %v109 = vsub.s32 4, %v85
    %v110 = vsel %vm25, %v109, %v85
    %v111 = vsel %vm24, %v21, %v108
    %v112 = vsel %vm24, 0, %v110
    %v113 = vcosq.f32.pop %v111
    %v114 = vsinq.f32.pop %v111
    %vm115 = vweird.f32 %v21
    %v116 = vadd.s32 %v112, 3
    %v117 = vand.u32 %v116, 3
    %vm118 = vcmp.lt.s32.totalorder %v117, 2
    %vm119 = vcmp.eq.s32.totalorder %v117, 0
    %v120 = vxor.u32 %v114, 2147483648
    %v121 = vsel %vm119, %v113, %v120
    %vm122 = vcmp.eq.s32.totalorder %v117, 2
    %v123 = vxor.u32 %v113, 2147483648
    %v124 = vsel %vm122, %v123, %v114
    %v125 = vsel %vm118, %v121, %v124
    %v126 = vsel %vm115, nan, %v125
    %v127 = vand.u32 2147483647, %v22
    %vm128 = vcmp.le.f32.partialorder %v127, 0.7853982
    %vm129 = vcmp.lt.s32.totalorder %v22, 0
    %v130 = vand.u32 %v22, 2139095040
    %v131 = vshrl.u32 %v130, 23
    %v132 = vsub.s32 %v131, 127
    %v133 = vand.u32 2147483647, %v22
    %v134 = vand.u32 %v133, 8388607
    %v135 = vor.u32 %v134, 8388608
    %v136 = vsub.s32 0, %v135
    %v137 = vadd.s32 %v132, 1
    %vm138 = vcmp.gt.s32.totalorder %v137, 0
    %v139 = vsel %vm138, %v137, 0
    %v140 = vshrl.u32 %v139, 5
    %v141 = vand.u32 %v139, 31
    %v142 = vsub.s32 32, %v141
    %v143 = vshrl.u32 683565275, %v142
    %v144 = vshll.u32 683565275, %v141
    %v145 = vshrl.u32 2475754826, %v142
    %v146 = vor.u32 %v144, %v145
    %v147 = vshll.u32 2475754826, %v141
    %v148 = vshrl.u32 2131351028, %v142
    %v149 = vor.u32 %v147, %v148
    %v150 = vshll.u32 2131351028, %v141
    %v151 = vshrl.u32 2102212464, %v142
    %v152 = vor.u32 %v150, %v151
    %v153 = vshll.u32 2102212464, %v141
    %v154 = vshrl.u32 920167782, %v142
    %v155 = vor.u32 %v153, %v154
    %v156 = vshll.u32 920167782, %v141
    %v157 = vshrl.u32 1326507024, %v142
    %v158 = vor.u32 %v156, %v157
    %vm159 = vcmp.lt.s32.totalorder %v140, 1
    %vm160 = vcmp.lt.s32.totalorder %v140, 2
    %vm161 = vcmp.lt.s32.totalorder %v140, 3
    %vm162 = vcmp.lt.s32.totalorder %v140, 4
    %v163 = vsel %vm159, %v143, %v146
    %v164 = vsel %vm162, %v152, 2102212464
    %v165 = vsel %vm161, %v149, %v164
    %v166 = vsel %vm160, %v163, %v165
    %v167 = vsel %vm159, %v146, %v149
    %v168 = vsel %vm162, %v155, 920167782
    %v169 = vsel %vm161, %v152, %v168
    %v170 = vsel %vm160, %v167, %v169
    %v171 = vsel %vm159, %v149, %v152
    %v172 = vsel %vm162, %v158, 1326507024
    %v173 = vsel %vm161, %v155, %v172
    %v174 = vsel %vm160, %v171, %v173
    %v175 = vshll.u32 %v135, 8
    %v176 = vmul.u32.u64.compose %v175, %v174
    %v177 = vextract.low.u32 %v176
    %v178 = vextract.high.u32 %v176
    %v179 = vmul.u32.u64.compose %v175, %v170
    %v180 = vextract.low.u32 %v179
    %v181 = vextract.high.u32 %v179
    %v182 = vmul.u32 %v175, %v166
    %v183 = vadd.s32 %v178, %v180
    %vm184 = vc.u32 %v178, %v180
    %v185 = vadd.s32 %v181, 1
    %v186 = vsel %vm184, %v185, %v181
    %v187 = vadd.s32 %v182, %v186
    %v188 = vadd.s32 %v187, 536870912
    %v189 = vshrl.u32 %v188, 30
    %v190 = vshll.u32 %v189, 30
    %v191 = vsub.s32 %v187, %v190
    %vm192 = vcmp.lt.s32.totalorder %v191, 0
    %v193 = vsub.s32 0, %v191
    %v194 = vsel %vm192, %v193, %v191
    %v195 = vclz %v194
    %v196 = vsub.s32 %v195, 2
    %vm197 = vcmp.gt.s32.totalorder 0, %v196
    %v198 = vsel %vm197, 0, %v196
    %v199 = vsub.s32 32, %v198
    %v200 = vshll.u32 %v191, %v198
    %v201 = vshrl.u32 %v183, %v199
    %v202 = vor.u32 %v200, %v201
    %v203 = vsub.s32 4294967266, %v198
    %v204 = vadd.s32 %v203, 127
    %v205 = vshll.u32 %v204, 23
    %v206 = vor.u32 4788187, %v205
    %v207 = vand.u32 2147483647, %v206
    %v209 = vcvt.s32.f32 %v202
    %v210 = vmul.f32 %v209, %v207
    %v211 = vxor.u32 %v210, 2147483648
    %v212 = vsel %vm129, %v211, %v210
    %v213 = vsub.s32 4, %v189
    %v214 = vsel %vm129, %v213, %v189
    %v215 = vsel %vm128, %v22, %v212
    %v216 = vsel %vm128, 0, %v214
    %v217 = vcosq.f32.pop %v215
    %v218 = vsinq.f32.pop %v215
    %vm219 = vweird.f32 %v22
    %v220 = vadd.s32 %v216, 3
    %v221 = vand.u32 %v220, 3
    %vm222 = vcmp.lt.s32.totalorder %v221, 2
    %vm223 = vcmp.eq.s32.totalorder %v221, 0
    %v224 = vxor.u32 %v218, 2147483648
    %v225 = vsel %vm223, %v217, %v224
    %vm226 = vcmp.eq.s32.totalorder %v221, 2
    %v227 = vxor.u32 %v217, 2147483648
    %v228 = vsel %vm226, %v227, %v218
    %v229 = vsel %vm222, %v225, %v228
    %v230 = vsel %vm219, nan, %v229
    %231 = vst [vmem:[#allocation5] sm:$0xff] %v126
    %232 = vst [vmem:[#allocation5 + $0x8] sm:$0xff] %v230
    // Predicated region
    $region10: #{tpu_custom_call.1} parent=1 // pred_check
      _
    $region11: #{tpu_custom_call.1} parent=1 // pred_check_branch
      %234 = sbr.rel (0) target = $region13
    $region12: #{tpu_custom_call.1} parent=1 // pred_region
      %s236 = ssub.s32 256, 256
      %237 = vsyncadd [#allocation4], %s236
      %s239 = sshll.u32 [#allocation5], 4
      %s240 = int_to_ptr.vmem [resolvable:$true] %s239
      %242 = dma.vmem_to_hbm [thread:$0]  %s240, 256, %s1, [#allocation4]
    $region13: #{tpu_custom_call.1} parent=1 // pred_fallthru
      _
    // Predicated region
    $region14: #{tpu_custom_call.1} parent=1 // pred_check
      _
    $region15: #{tpu_custom_call.1} parent=1 // pred_check_branch
      %244 = sbr.rel (0) target = $region17
    $region16: #{tpu_custom_call.1} parent=1 // pred_region
      %245 = dma.done [#allocation4], 256
    $region17: #{tpu_custom_call.1} parent=1 // pred_fallthru
      _
    %246 = vsyncpa [#allocation3], 1
    %247 = vsyncpa [#allocation4], 1

</llo_original>
